<compile_context>
chip_gen: v5e
topology: v5e:2x2
jax: 0.10.0
libtpu: 0.0.40
codegen_flags: <defaults>
</compile_context>

<pallas_src>
import functools
import math

import jax
import jax.numpy as jnp
from jax.experimental import pallas as pl
from jax.experimental.pallas import tpu as pltpu


def _block_kernel(x_ref,
                  wq_ref, bq_ref, wk_ref, bk_ref, wv_ref, bv_ref,
                  w1_ref, b1_ref, w2_ref, b2_ref,
                  o_ref,
                  *, nheads):
    _, T, D = x_ref.shape
    Hd = D // nheads
    # NOTE: the PyTorch module scales by 1/sqrt(allH) (full hidden dim), not per-head dim.
    scale = 1.0 / math.sqrt(D)

    x = x_ref[0]                                                  # (T, D)

    # Hoist all loop-invariant weight loads once.
    wq, bq = wq_ref[...], bq_ref[...]
    wk, bk = wk_ref[...], bk_ref[...]
    wv, bv = wv_ref[...], bv_ref[...]

    q = jnp.dot(x, wq, preferred_element_type=jnp.float32) + bq   # (T, D)
    k = jnp.dot(x, wk, preferred_element_type=jnp.float32) + bk
    v = jnp.dot(x, wv, preferred_element_type=jnp.float32) + bv

    # Causal (lower-triangular) mask, built once.
    row = jax.lax.broadcasted_iota(jnp.int32, (T, T), 0)
    col = jax.lax.broadcasted_iota(jnp.int32, (T, T), 1)
    causal = col <= row                                           # (T, T)

    # Per-head attention: static Python loop (fully unrolled, nheads is small).
    head_outs = []
    for h in range(nheads):
        sl = slice(h * Hd, (h + 1) * Hd)
        qh, kh, vh = q[:, sl], k[:, sl], v[:, sl]                 # (T, Hd)
        att = jnp.dot(qh, kh.T, preferred_element_type=jnp.float32) * scale   # (T, T)
        att = jnp.where(causal, att, jnp.float32(-1e30))          # masked_fill(-inf)
        m = jnp.max(att, axis=-1, keepdims=True)
        e = jnp.exp(att - m)
        s = jnp.sum(e, axis=-1, keepdims=True)
        probs = e * (1.0 / s)                                     # row-wise reciprocal, no full-width divide
        head_outs.append(jnp.dot(probs, vh, preferred_element_type=jnp.float32))
    attn_out = jnp.concatenate(head_outs, axis=-1)                # (T, D), matches uncast() layout

    x1 = x + attn_out                                             # first residual

    # MLP: Linear(D, 4D) -> GELU -> Linear(4D, D) -> Dropout(identity at inference)
    h1 = jnp.dot(x1, w1_ref[...], preferred_element_type=jnp.float32) + b1_ref[...]
    # TODO(synk): tanh-approx GELU used instead of exact erf-based nn.GELU (erf lowering not relied on).
    g = 0.5 * h1 * (1.0 + jnp.tanh(0.7978845608028654 * (h1 + 0.044715 * h1 * h1 * h1)))
    mlp_out = jnp.dot(g, w2_ref[...], preferred_element_type=jnp.float32) + b2_ref[...]

    o_ref[0] = (x1 + mlp_out).astype(o_ref.dtype)                 # second residual


@functools.partial(jax.jit, static_argnames=("nheads",))
def block_forward(x, wq, bq, wk, bk, wv, bv, w1, b1, w2, b2, *, nheads):
    """x: (B, T, D). Weights in (in, out) layout (= nn.Linear.weight.T); biases (1, out)."""
    B, T, D = x.shape
    D4 = w1.shape[1]

    kernel = functools.partial(_block_kernel, nheads=nheads)

    def wspec(shape):
        return pl.BlockSpec(shape, lambda b, _s=shape: (0,) * len(_s))

    return pl.pallas_call(
        kernel,
        out_shape=jax.ShapeDtypeStruct((B, T, D), x.dtype),
        grid=(B,),
        in_specs=[
            pl.BlockSpec((1, T, D), lambda b: (b, 0, 0)),   # x: one batch row per program
            wspec((D, D)), wspec((1, D)),                   # Wq, bq
            wspec((D, D)), wspec((1, D)),                   # Wk, bk
            wspec((D, D)), wspec((1, D)),                   # Wv, bv
            wspec((D, D4)), wspec((1, D4)),                 # MLP W1, b1
            wspec((D4, D)), wspec((1, D)),                  # MLP W2, b2
        ],
        out_specs=pl.BlockSpec((1, T, D), lambda b: (b, 0, 0)),
        compiler_params=pltpu.CompilerParams(
            dimension_semantics=("parallel",)),             # batch rows -> both TCs on v7x
    )(x, wq, bq, wk, bk, wv, bv, w1, b1, w2, b2)


if __name__ == "__main__":
    B, T = 2, 8            # batch, sequence length (== block_size)
    D, NH = 32, 4          # h_dim, nhead  (head dim = 8)
    D4 = 4 * D

    key = jax.random.PRNGKey(0)
    ks = jax.random.split(key, 12)

    def lin_w(k, fan_in, shape):
        bound = 1.0 / math.sqrt(fan_in)
        return jax.random.uniform(k, shape, jnp.float32, -bound, bound)

    x = jax.random.normal(ks[0], (B, T, D), jnp.float32)

    # (in, out) layout == transpose of nn.Linear.weight; biases as (1, out).
    wq = lin_w(ks[1], D, (D, D));   bq = lin_w(ks[2], D, (1, D))
    wk = lin_w(ks[3], D, (D, D));   bk = lin_w(ks[4], D, (1, D))
    wv = lin_w(ks[5], D, (D, D));   bv = lin_w(ks[6], D, (1, D))
    w1 = lin_w(ks[7], D, (D, D4));  b1 = lin_w(ks[8], D, (1, D4))
    w2 = lin_w(ks[9], D4, (D4, D)); b2 = lin_w(ks[10], D4, (1, D))

    y = block_forward(x, wq, bq, wk, bk, wv, bv, w1, b1, w2, b2, nheads=NH)
    y = jax.block_until_ready(y)

    assert y.shape == (B, T, D), y.shape
    assert y.dtype == jnp.float32
    assert bool(jnp.all(jnp.isfinite(y)))
    print("KERNEL_OK")
</pallas_src>

<mosaic_0001>
module attributes {stable_mosaic.version = 11 : i64} {
  func.func @_block_kernel(%arg0: i32, %arg1: memref<1x8x32xf32, #tpu.memory_space<vmem>>, %arg2: memref<32x32xf32, #tpu.memory_space<vmem>>, %arg3: memref<1x32xf32, #tpu.memory_space<vmem>>, %arg4: memref<32x32xf32, #tpu.memory_space<vmem>>, %arg5: memref<1x32xf32, #tpu.memory_space<vmem>>, %arg6: memref<32x32xf32, #tpu.memory_space<vmem>>, %arg7: memref<1x32xf32, #tpu.memory_space<vmem>>, %arg8: memref<32x128xf32, #tpu.memory_space<vmem>>, %arg9: memref<1x128xf32, #tpu.memory_space<vmem>>, %arg10: memref<128x32xf32, #tpu.memory_space<vmem>>, %arg11: memref<1x32xf32, #tpu.memory_space<vmem>>, %arg12: memref<1x8x32xf32, #tpu.memory_space<vmem>>) attributes {dimension_semantics = [#tpu.dimension_semantics<parallel>], iteration_bounds = array<i64: 2>, scalar_prefetch = 0 : i64, scratch_operands = 0 : i64, tpu.core_type = #tpu.core_type<tc>, window_params = [{transform_indices = @transform_0, window_bounds = array<i64: 1, 8, 32>}, {pipeline_mode = #tpu.pipeline_mode<synchronous>, transform_indices = @transform_1, window_bounds = array<i64: 32, 32>}, {pipeline_mode = #tpu.pipeline_mode<synchronous>, transform_indices = @transform_2, window_bounds = array<i64: 1, 32>}, {pipeline_mode = #tpu.pipeline_mode<synchronous>, transform_indices = @transform_3, window_bounds = array<i64: 32, 32>}, {pipeline_mode = #tpu.pipeline_mode<synchronous>, transform_indices = @transform_4, window_bounds = array<i64: 1, 32>}, {pipeline_mode = #tpu.pipeline_mode<synchronous>, transform_indices = @transform_5, window_bounds = array<i64: 32, 32>}, {pipeline_mode = #tpu.pipeline_mode<synchronous>, transform_indices = @transform_6, window_bounds = array<i64: 1, 32>}, {pipeline_mode = #tpu.pipeline_mode<synchronous>, transform_indices = @transform_7, window_bounds = array<i64: 32, 128>}, {pipeline_mode = #tpu.pipeline_mode<synchronous>, transform_indices = @transform_8, window_bounds = array<i64: 1, 128>}, {pipeline_mode = #tpu.pipeline_mode<synchronous>, transform_indices = @transform_9, window_bounds = array<i64: 128, 32>}, {pipeline_mode = #tpu.pipeline_mode<synchronous>, transform_indices = @transform_10, window_bounds = array<i64: 1, 32>}, {transform_indices = @transform_11, window_bounds = array<i64: 1, 8, 32>}]} {
    %c0 = arith.constant 0 : index
    %c0_0 = arith.constant 0 : index
    %c0_1 = arith.constant 0 : index
    %0 = vector.load %arg1[%c0, %c0_0, %c0_1] : memref<1x8x32xf32, #tpu.memory_space<vmem>>, vector<1x8x32xf32>
    %1 = vector.shape_cast %0 : vector<1x8x32xf32> to vector<8x32xf32>
    %c0_2 = arith.constant 0 : index
    %c0_3 = arith.constant 0 : index
    %2 = vector.load %arg2[%c0_2, %c0_3] : memref<32x32xf32, #tpu.memory_space<vmem>>, vector<32x32xf32>
    %c0_4 = arith.constant 0 : index
    %c0_5 = arith.constant 0 : index
    %3 = vector.load %arg3[%c0_4, %c0_5] : memref<1x32xf32, #tpu.memory_space<vmem>>, vector<1x32xf32>
    %c0_6 = arith.constant 0 : index
    %c0_7 = arith.constant 0 : index
    %4 = vector.load %arg4[%c0_6, %c0_7] : memref<32x32xf32, #tpu.memory_space<vmem>>, vector<32x32xf32>
    %c0_8 = arith.constant 0 : index
    %c0_9 = arith.constant 0 : index
    %5 = vector.load %arg5[%c0_8, %c0_9] : memref<1x32xf32, #tpu.memory_space<vmem>>, vector<1x32xf32>
    %c0_10 = arith.constant 0 : index
    %c0_11 = arith.constant 0 : index
    %6 = vector.load %arg6[%c0_10, %c0_11] : memref<32x32xf32, #tpu.memory_space<vmem>>, vector<32x32xf32>
    %c0_12 = arith.constant 0 : index
    %c0_13 = arith.constant 0 : index
    %7 = vector.load %arg7[%c0_12, %c0_13] : memref<1x32xf32, #tpu.memory_space<vmem>>, vector<1x32xf32>
    %cst = arith.constant dense<0.000000e+00> : vector<8x32xf32>
    %8 = tpu.matmul %1, %2, %cst {dimension_numbers = #tpu.dot_dimension_numbers<[1], [0], [0], [1], [0, 0, 1, 1], [], []>} : vector<8x32xf32>, vector<32x32xf32>, vector<8x32xf32> -> vector<8x32xf32>
    %9 = vector.broadcast %3 : vector<1x32xf32> to vector<8x32xf32>
    %10 = arith.addf %8, %9 : vector<8x32xf32>
    %cst_14 = arith.constant dense<0.000000e+00> : vector<8x32xf32>
    %11 = tpu.matmul %1, %4, %cst_14 {dimension_numbers = #tpu.dot_dimension_numbers<[1], [0], [0], [1], [0, 0, 1, 1], [], []>} : vector<8x32xf32>, vector<32x32xf32>, vector<8x32xf32> -> vector<8x32xf32>
    %12 = vector.broadcast %5 : vector<1x32xf32> to vector<8x32xf32>
    %13 = arith.addf %11, %12 : vector<8x32xf32>
    %cst_15 = arith.constant dense<0.000000e+00> : vector<8x32xf32>
    %14 = tpu.matmul %1, %6, %cst_15 {dimension_numbers = #tpu.dot_dimension_numbers<[1], [0], [0], [1], [0, 0, 1, 1], [], []>} : vector<8x32xf32>, vector<32x32xf32>, vector<8x32xf32> -> vector<8x32xf32>
    %15 = vector.broadcast %7 : vector<1x32xf32> to vector<8x32xf32>
    %16 = arith.addf %14, %15 : vector<8x32xf32>
    %17 = tpu.iota {dimensions = array<i32: 0>} : vector<8x8xi32>
    %18 = tpu.iota {dimensions = array<i32: 1>} : vector<8x8xi32>
    %19 = arith.cmpi sle, %18, %17 : vector<8x8xi32>
    %20 = vector.extract_strided_slice %10 {offsets = [0, 0], sizes = [8, 8], strides = [1, 1]} : vector<8x32xf32> to vector<8x8xf32>
    %21 = vector.extract_strided_slice %13 {offsets = [0, 0], sizes = [8, 8], strides = [1, 1]} : vector<8x32xf32> to vector<8x8xf32>
    %22 = vector.extract_strided_slice %16 {offsets = [0, 0], sizes = [8, 8], strides = [1, 1]} : vector<8x32xf32> to vector<8x8xf32>
    %23 = tpu.transpose %21, [1, 0] : vector<8x8xf32> -> vector<8x8xf32>
    %cst_16 = arith.constant dense<0.000000e+00> : vector<8x8xf32>
    %24 = tpu.matmul %20, %23, %cst_16 {dimension_numbers = #tpu.dot_dimension_numbers<[1], [0], [0], [1], [0, 0, 1, 1], [], []>} : vector<8x8xf32>, vector<8x8xf32>, vector<8x8xf32> -> vector<8x8xf32>
    %cst_17 = arith.constant 0.176776692 : f32
    %25 = vector.broadcast %cst_17 : f32 to vector<8x8xf32>
    %26 = arith.mulf %24, %25 : vector<8x8xf32>
    %cst_18 = arith.constant -1.000000e+30 : f32
    %27 = vector.broadcast %cst_18 : f32 to vector<8x8xf32>
    %28 = arith.select %19, %26, %27 : vector<8x8xi1>, vector<8x8xf32>
    %cst_19 = arith.constant dense<0xFF800000> : vector<8xf32>
    %29 = vector.multi_reduction <maximumf>, %28, %cst_19 [1] : vector<8x8xf32> to vector<8xf32>
    %30 = vector.shape_cast %29 : vector<8xf32> to vector<8x1xf32>
    %31 = vector.broadcast %30 : vector<8x1xf32> to vector<8x8xf32>
    %32 = arith.subf %28, %31 : vector<8x8xf32>
    %33 = math.exp %32 : vector<8x8xf32>
    %cst_20 = arith.constant dense<0.000000e+00> : vector<8xf32>
    %34 = vector.multi_reduction <add>, %33, %cst_20 [1] : vector<8x8xf32> to vector<8xf32>
    %35 = vector.shape_cast %34 : vector<8xf32> to vector<8x1xf32>
    %cst_21 = arith.constant 1.000000e+00 : f32
    %36 = vector.broadcast %cst_21 : f32 to vector<8x1xf32>
    %37 = arith.divf %36, %35 : vector<8x1xf32>
    %38 = vector.broadcast %37 : vector<8x1xf32> to vector<8x8xf32>
    %39 = arith.mulf %33, %38 : vector<8x8xf32>
    %cst_22 = arith.constant dense<0.000000e+00> : vector<8x8xf32>
    %40 = tpu.matmul %39, %22, %cst_22 {dimension_numbers = #tpu.dot_dimension_numbers<[1], [0], [0], [1], [0, 0, 1, 1], [], []>} : vector<8x8xf32>, vector<8x8xf32>, vector<8x8xf32> -> vector<8x8xf32>
    %41 = vector.extract_strided_slice %10 {offsets = [0, 8], sizes = [8, 8], strides = [1, 1]} : vector<8x32xf32> to vector<8x8xf32>
    %42 = vector.extract_strided_slice %13 {offsets = [0, 8], sizes = [8, 8], strides = [1, 1]} : vector<8x32xf32> to vector<8x8xf32>
    %43 = vector.extract_strided_slice %16 {offsets = [0, 8], sizes = [8, 8], strides = [1, 1]} : vector<8x32xf32> to vector<8x8xf32>
    %44 = tpu.transpose %42, [1, 0] : vector<8x8xf32> -> vector<8x8xf32>
    %cst_23 = arith.constant dense<0.000000e+00> : vector<8x8xf32>
    %45 = tpu.matmul %41, %44, %cst_23 {dimension_numbers = #tpu.dot_dimension_numbers<[1], [0], [0], [1], [0, 0, 1, 1], [], []>} : vector<8x8xf32>, vector<8x8xf32>, vector<8x8xf32> -> vector<8x8xf32>
    %cst_24 = arith.constant 0.176776692 : f32
    %46 = vector.broadcast %cst_24 : f32 to vector<8x8xf32>
    %47 = arith.mulf %45, %46 : vector<8x8xf32>
    %cst_25 = arith.constant -1.000000e+30 : f32
    %48 = vector.broadcast %cst_25 : f32 to vector<8x8xf32>
    %49 = arith.select %19, %47, %48 : vector<8x8xi1>, vector<8x8xf32>
    %cst_26 = arith.constant dense<0xFF800000> : vector<8xf32>
    %50 = vector.multi_reduction <maximumf>, %49, %cst_26 [1] : vector<8x8xf32> to vector<8xf32>
    %51 = vector.shape_cast %50 : vector<8xf32> to vector<8x1xf32>
    %52 = vector.broadcast %51 : vector<8x1xf32> to vector<8x8xf32>
    %53 = arith.subf %49, %52 : vector<8x8xf32>
    %54 = math.exp %53 : vector<8x8xf32>
    %cst_27 = arith.constant dense<0.000000e+00> : vector<8xf32>
    %55 = vector.multi_reduction <add>, %54, %cst_27 [1] : vector<8x8xf32> to vector<8xf32>
    %56 = vector.shape_cast %55 : vector<8xf32> to vector<8x1xf32>
    %cst_28 = arith.constant 1.000000e+00 : f32
    %57 = vector.broadcast %cst_28 : f32 to vector<8x1xf32>
    %58 = arith.divf %57, %56 : vector<8x1xf32>
    %59 = vector.broadcast %58 : vector<8x1xf32> to vector<8x8xf32>
    %60 = arith.mulf %54, %59 : vector<8x8xf32>
    %cst_29 = arith.constant dense<0.000000e+00> : vector<8x8xf32>
    %61 = tpu.matmul %60, %43, %cst_29 {dimension_numbers = #tpu.dot_dimension_numbers<[1], [0], [0], [1], [0, 0, 1, 1], [], []>} : vector<8x8xf32>, vector<8x8xf32>, vector<8x8xf32> -> vector<8x8xf32>
    %62 = vector.extract_strided_slice %10 {offsets = [0, 16], sizes = [8, 8], strides = [1, 1]} : vector<8x32xf32> to vector<8x8xf32>
    %63 = vector.extract_strided_slice %13 {offsets = [0, 16], sizes = [8, 8], strides = [1, 1]} : vector<8x32xf32> to vector<8x8xf32>
    %64 = vector.extract_strided_slice %16 {offsets = [0, 16], sizes = [8, 8], strides = [1, 1]} : vector<8x32xf32> to vector<8x8xf32>
    %65 = tpu.transpose %63, [1, 0] : vector<8x8xf32> -> vector<8x8xf32>
    %cst_30 = arith.constant dense<0.000000e+00> : vector<8x8xf32>
    %66 = tpu.matmul %62, %65, %cst_30 {dimension_numbers = #tpu.dot_dimension_numbers<[1], [0], [0], [1], [0, 0, 1, 1], [], []>} : vector<8x8xf32>, vector<8x8xf32>, vector<8x8xf32> -> vector<8x8xf32>
    %cst_31 = arith.constant 0.176776692 : f32
    %67 = vector.broadcast %cst_31 : f32 to vector<8x8xf32>
    %68 = arith.mulf %66, %67 : vector<8x8xf32>
    %cst_32 = arith.constant -1.000000e+30 : f32
    %69 = vector.broadcast %cst_32 : f32 to vector<8x8xf32>
    %70 = arith.select %19, %68, %69 : vector<8x8xi1>, vector<8x8xf32>
    %cst_33 = arith.constant dense<0xFF800000> : vector<8xf32>
    %71 = vector.multi_reduction <maximumf>, %70, %cst_33 [1] : vector<8x8xf32> to vector<8xf32>
    %72 = vector.shape_cast %71 : vector<8xf32> to vector<8x1xf32>
    %73 = vector.broadcast %72 : vector<8x1xf32> to vector<8x8xf32>
    %74 = arith.subf %70, %73 : vector<8x8xf32>
    %75 = math.exp %74 : vector<8x8xf32>
    %cst_34 = arith.constant dense<0.000000e+00> : vector<8xf32>
    %76 = vector.multi_reduction <add>, %75, %cst_34 [1] : vector<8x8xf32> to vector<8xf32>
    %77 = vector.shape_cast %76 : vector<8xf32> to vector<8x1xf32>
    %cst_35 = arith.constant 1.000000e+00 : f32
    %78 = vector.broadcast %cst_35 : f32 to vector<8x1xf32>
    %79 = arith.divf %78, %77 : vector<8x1xf32>
    %80 = vector.broadcast %79 : vector<8x1xf32> to vector<8x8xf32>
    %81 = arith.mulf %75, %80 : vector<8x8xf32>
    %cst_36 = arith.constant dense<0.000000e+00> : vector<8x8xf32>
    %82 = tpu.matmul %81, %64, %cst_36 {dimension_numbers = #tpu.dot_dimension_numbers<[1], [0], [0], [1], [0, 0, 1, 1], [], []>} : vector<8x8xf32>, vector<8x8xf32>, vector<8x8xf32> -> vector<8x8xf32>
    %83 = vector.extract_strided_slice %10 {offsets = [0, 24], sizes = [8, 8], strides = [1, 1]} : vector<8x32xf32> to vector<8x8xf32>
    %84 = vector.extract_strided_slice %13 {offsets = [0, 24], sizes = [8, 8], strides = [1, 1]} : vector<8x32xf32> to vector<8x8xf32>
    %85 = vector.extract_strided_slice %16 {offsets = [0, 24], sizes = [8, 8], strides = [1, 1]} : vector<8x32xf32> to vector<8x8xf32>
    %86 = tpu.transpose %84, [1, 0] : vector<8x8xf32> -> vector<8x8xf32>
    %cst_37 = arith.constant dense<0.000000e+00> : vector<8x8xf32>
    %87 = tpu.matmul %83, %86, %cst_37 {dimension_numbers = #tpu.dot_dimension_numbers<[1], [0], [0], [1], [0, 0, 1, 1], [], []>} : vector<8x8xf32>, vector<8x8xf32>, vector<8x8xf32> -> vector<8x8xf32>
    %cst_38 = arith.constant 0.176776692 : f32
    %88 = vector.broadcast %cst_38 : f32 to vector<8x8xf32>
    %89 = arith.mulf %87, %88 : vector<8x8xf32>
    %cst_39 = arith.constant -1.000000e+30 : f32
    %90 = vector.broadcast %cst_39 : f32 to vector<8x8xf32>
    %91 = arith.select %19, %89, %90 : vector<8x8xi1>, vector<8x8xf32>
    %cst_40 = arith.constant dense<0xFF800000> : vector<8xf32>
    %92 = vector.multi_reduction <maximumf>, %91, %cst_40 [1] : vector<8x8xf32> to vector<8xf32>
    %93 = vector.shape_cast %92 : vector<8xf32> to vector<8x1xf32>
    %94 = vector.broadcast %93 : vector<8x1xf32> to vector<8x8xf32>
    %95 = arith.subf %91, %94 : vector<8x8xf32>
    %96 = math.exp %95 : vector<8x8xf32>
    %cst_41 = arith.constant dense<0.000000e+00> : vector<8xf32>
    %97 = vector.multi_reduction <add>, %96, %cst_41 [1] : vector<8x8xf32> to vector<8xf32>
    %98 = vector.shape_cast %97 : vector<8xf32> to vector<8x1xf32>
    %cst_42 = arith.constant 1.000000e+00 : f32
    %99 = vector.broadcast %cst_42 : f32 to vector<8x1xf32>
    %100 = arith.divf %99, %98 : vector<8x1xf32>
    %101 = vector.broadcast %100 : vector<8x1xf32> to vector<8x8xf32>
    %102 = arith.mulf %96, %101 : vector<8x8xf32>
    %cst_43 = arith.constant dense<0.000000e+00> : vector<8x8xf32>
    %103 = tpu.matmul %102, %85, %cst_43 {dimension_numbers = #tpu.dot_dimension_numbers<[1], [0], [0], [1], [0, 0, 1, 1], [], []>} : vector<8x8xf32>, vector<8x8xf32>, vector<8x8xf32> -> vector<8x8xf32>
    %104 = tpu.concatenate %40, %61, %82, %103 in 1 : vector<8x8xf32>, vector<8x8xf32>, vector<8x8xf32>, vector<8x8xf32> -> vector<8x32xf32>
    %105 = arith.addf %1, %104 : vector<8x32xf32>
    %c0_44 = arith.constant 0 : index
    %c0_45 = arith.constant 0 : index
    %106 = vector.load %arg8[%c0_44, %c0_45] : memref<32x128xf32, #tpu.memory_space<vmem>>, vector<32x128xf32>
    %cst_46 = arith.constant dense<0.000000e+00> : vector<8x128xf32>
    %107 = tpu.matmul %105, %106, %cst_46 {dimension_numbers = #tpu.dot_dimension_numbers<[1], [0], [0], [1], [0, 0, 1, 1], [], []>} : vector<8x32xf32>, vector<32x128xf32>, vector<8x128xf32> -> vector<8x128xf32>
    %c0_47 = arith.constant 0 : index
    %c0_48 = arith.constant 0 : index
    %108 = vector.load %arg9[%c0_47, %c0_48] : memref<1x128xf32, #tpu.memory_space<vmem>>, vector<1x128xf32>
    %109 = vector.broadcast %108 : vector<1x128xf32> to vector<8x128xf32>
    %110 = arith.addf %107, %109 : vector<8x128xf32>
    %cst_49 = arith.constant 5.000000e-01 : f32
    %111 = vector.broadcast %cst_49 : f32 to vector<8x128xf32>
    %112 = arith.mulf %111, %110 : vector<8x128xf32>
    %cst_50 = arith.constant 4.471500e-02 : f32
    %113 = vector.broadcast %cst_50 : f32 to vector<8x128xf32>
    %114 = arith.mulf %113, %110 : vector<8x128xf32>
    %115 = arith.mulf %114, %110 : vector<8x128xf32>
    %116 = arith.mulf %115, %110 : vector<8x128xf32>
    %117 = arith.addf %110, %116 : vector<8x128xf32>
    %cst_51 = arith.constant 0.797884583 : f32
    %118 = vector.broadcast %cst_51 : f32 to vector<8x128xf32>
    %119 = arith.mulf %118, %117 : vector<8x128xf32>
    %120 = math.tanh %119 : vector<8x128xf32>
    %cst_52 = arith.constant 1.000000e+00 : f32
    %121 = vector.broadcast %cst_52 : f32 to vector<8x128xf32>
    %122 = arith.addf %121, %120 : vector<8x128xf32>
    %123 = arith.mulf %112, %122 : vector<8x128xf32>
    %c0_53 = arith.constant 0 : index
    %c0_54 = arith.constant 0 : index
    %124 = vector.load %arg10[%c0_53, %c0_54] : memref<128x32xf32, #tpu.memory_space<vmem>>, vector<128x32xf32>
    %cst_55 = arith.constant dense<0.000000e+00> : vector<8x32xf32>
    %125 = tpu.matmul %123, %124, %cst_55 {dimension_numbers = #tpu.dot_dimension_numbers<[1], [0], [0], [1], [0, 0, 1, 1], [], []>} : vector<8x128xf32>, vector<128x32xf32>, vector<8x32xf32> -> vector<8x32xf32>
    %c0_56 = arith.constant 0 : index
    %c0_57 = arith.constant 0 : index
    %126 = vector.load %arg11[%c0_56, %c0_57] : memref<1x32xf32, #tpu.memory_space<vmem>>, vector<1x32xf32>
    %127 = vector.broadcast %126 : vector<1x32xf32> to vector<8x32xf32>
    %128 = arith.addf %125, %127 : vector<8x32xf32>
    %129 = arith.addf %105, %128 : vector<8x32xf32>
    %c0_58 = arith.constant 0 : index
    %c0_59 = arith.constant 0 : index
    %c0_60 = arith.constant 0 : index
    %130 = vector.load %arg12[%c0_58, %c0_59, %c0_60] : memref<1x8x32xf32, #tpu.memory_space<vmem>>, vector<1x8x32xf32>
    %131 = vector.shape_cast %130 : vector<1x8x32xf32> to vector<8x32xf32>
    %132 = vector.shape_cast %129 : vector<8x32xf32> to vector<1x8x32xf32>
    tpu.vector_store %arg12[%c0_58, %c0_59, %c0_60], %132 {strides = array<i32>} : memref<1x8x32xf32, #tpu.memory_space<vmem>>, vector<1x8x32xf32>,
    return
  }
  func.func @transform_0(%arg0: i32) -> (i32, i32, i32) {
    %c0_i32 = arith.constant 0 : i32
    %c0_i32_0 = arith.constant 0 : i32
    %c0_i32_1 = arith.constant 0 : i32
    return %arg0, %c0_i32, %c0_i32_0 : i32, i32, i32
  }
  func.func @transform_1(%arg0: i32) -> (i32, i32) {
    %c0_i32 = arith.constant 0 : i32
    %c0_i32_0 = arith.constant 0 : i32
    %c0_i32_1 = arith.constant 0 : i32
    return %c0_i32, %c0_i32_0 : i32, i32
  }
  func.func @transform_2(%arg0: i32) -> (i32, i32) {
    %c0_i32 = arith.constant 0 : i32
    %c0_i32_0 = arith.constant 0 : i32
    %c0_i32_1 = arith.constant 0 : i32
    return %c0_i32, %c0_i32_0 : i32, i32
  }
  func.func @transform_3(%arg0: i32) -> (i32, i32) {
    %c0_i32 = arith.constant 0 : i32
    %c0_i32_0 = arith.constant 0 : i32
    %c0_i32_1 = arith.constant 0 : i32
    return %c0_i32, %c0_i32_0 : i32, i32
  }
  func.func @transform_4(%arg0: i32) -> (i32, i32) {
    %c0_i32 = arith.constant 0 : i32
    %c0_i32_0 = arith.constant 0 : i32
    %c0_i32_1 = arith.constant 0 : i32
    return %c0_i32, %c0_i32_0 : i32, i32
  }
  func.func @transform_5(%arg0: i32) -> (i32, i32) {
    %c0_i32 = arith.constant 0 : i32
    %c0_i32_0 = arith.constant 0 : i32
    %c0_i32_1 = arith.constant 0 : i32
    return %c0_i32, %c0_i32_0 : i32, i32
  }
  func.func @transform_6(%arg0: i32) -> (i32, i32) {
    %c0_i32 = arith.constant 0 : i32
    %c0_i32_0 = arith.constant 0 : i32
    %c0_i32_1 = arith.constant 0 : i32
    return %c0_i32, %c0_i32_0 : i32, i32
  }
  func.func @transform_7(%arg0: i32) -> (i32, i32) {
    %c0_i32 = arith.constant 0 : i32
    %c0_i32_0 = arith.constant 0 : i32
    %c0_i32_1 = arith.constant 0 : i32
    return %c0_i32, %c0_i32_0 : i32, i32
  }
  func.func @transform_8(%arg0: i32) -> (i32, i32) {
    %c0_i32 = arith.constant 0 : i32
    %c0_i32_0 = arith.constant 0 : i32
    %c0_i32_1 = arith.constant 0 : i32
    return %c0_i32, %c0_i32_0 : i32, i32
  }
  func.func @transform_9(%arg0: i32) -> (i32, i32) {
    %c0_i32 = arith.constant 0 : i32
    %c0_i32_0 = arith.constant 0 : i32
    %c0_i32_1 = arith.constant 0 : i32
    return %c0_i32, %c0_i32_0 : i32, i32
  }
  func.func @transform_10(%arg0: i32) -> (i32, i32) {
    %c0_i32 = arith.constant 0 : i32
    %c0_i32_0 = arith.constant 0 : i32
    %c0_i32_1 = arith.constant 0 : i32
    return %c0_i32, %c0_i32_0 : i32, i32
  }
  func.func @transform_11(%arg0: i32) -> (i32, i32, i32) {
    %c0_i32 = arith.constant 0 : i32
    %c0_i32_0 = arith.constant 0 : i32
    %c0_i32_1 = arith.constant 0 : i32
    return %arg0, %c0_i32, %c0_i32_0 : i32, i32, i32
  }
}

</mosaic_0001>

<llo_original>
// kernel: block_forward.1
$region0: #{block_forward.1}
  #allocation0 [shape = 'u32[]', space=smem, size = 0x4, offset = 0x4, fixed_abs, tag = 'smem constant byte address 0x4 - core index']
  #allocation1 [shape = 'u32[72,128]{1,0:T(1,128)}', space=vmem, size = 0x9000, scoped, tag = 'internal scratch']
  %s0 = inlined_call_operand.vmem [shape: f32[2,8,32], index: 0, kind: input, shape index: {}]
  %s1 = inlined_call_operand.vmem [shape: f32[32,32], index: 1, kind: input, shape index: {}]
  %s2 = inlined_call_operand.vmem [shape: f32[1,32], index: 2, kind: input, shape index: {}]
  %s3 = inlined_call_operand.vmem [shape: f32[32,32], index: 3, kind: input, shape index: {}]
  %s4 = inlined_call_operand.vmem [shape: f32[1,32], index: 4, kind: input, shape index: {}]
  %s5 = inlined_call_operand.vmem [shape: f32[32,32], index: 5, kind: input, shape index: {}]
  %s6 = inlined_call_operand.vmem [shape: f32[1,32], index: 6, kind: input, shape index: {}]
  %s7 = inlined_call_operand.vmem [shape: f32[32,128], index: 7, kind: input, shape index: {}]
  %s8 = inlined_call_operand.vmem [shape: f32[1,128], index: 8, kind: input, shape index: {}]
  %s9 = inlined_call_operand.vmem [shape: f32[128,32], index: 9, kind: input, shape index: {}]
  %s10 = inlined_call_operand.vmem [shape: f32[1,32], index: 10, kind: input, shape index: {}]
  %s11 = inlined_call_operand.hbm [shape: f32[2,8,32], index: 11, kind: output, shape index: {}]
  %s12 = sld [smem:[#allocation0]]
  $region77: #{block_forward.1} parent=0
    _
  %s14 = ssub.s32 1, %s12
  %s15 = scalar_select 0, %s14, %s12
  $region1: #{block_forward.1} parent=0
    #allocation2 [shape = 'u8[8192]{0}', space=vmem, size = 0x2000, scoped, tag = 'output window, operand 0']
    #allocation3 [shape = 's32[2]{0}', space=sflag, size = 0x8, scoped, tag = 'scoped memory for block_forward.1']
    %16 = vsyncpa [#allocation3], 0
    %s17 = scalar_lea.sflag [#allocation3], 1
    %18 = vsyncpa %s17, 0
    loop: start=0, step=1, limit=4
    $region2: #{block_forward.1} parent=1 // loop_pre_header
      _
    $region3: #{block_forward.1} parent=1 // loop_header
      %s20 = sphi 0, %s24
      %p21 = scmp.ge.s32.totalorder %s20, 4
      %s30 = sphi 0, %s32
      %s33 = sphi 0, %s30
      %s34 = sphi 0, %s33
      %s50 = sphi 0, %s34
      %s54 = sphi 0, %s54
      %s56 = sphi 0, %s54
      %s57 = sphi 0, %s56
      %s71 = sphi 0, %s57
      %s75 = sphi 0, %s75
      %s77 = sphi 0, %s75
      %s78 = sphi 0, %s77
      %s92 = sphi 0, %s78
      %s96 = sphi 0, %s96
      %s98 = sphi 0, %s96
      %s99 = sphi 0, %s98
      %s113 = sphi 0, %s99
      %s117 = sphi 0, %s117
      %s119 = sphi 0, %s117
      %s120 = sphi 0, %s119
      %s134 = sphi 0, %s120
      %s138 = sphi 0, %s138
      %s140 = sphi 0, %s138
      %s141 = sphi 0, %s140
      %s155 = sphi 0, %s141
      %s159 = sphi 0, %s159
      %s161 = sphi 0, %s159
      %s162 = sphi 0, %s161
      %s176 = sphi 0, %s162
      %s180 = sphi 0, %s180
      %s182 = sphi 0, %s180
      %s183 = sphi 0, %s182
      %s197 = sphi 0, %s183
      %s201 = sphi 0, %s201
      %s203 = sphi 0, %s201
      %s204 = sphi 0, %s203
      %s218 = sphi 0, %s204
      %s222 = sphi 0, %s222
      %s224 = sphi 0, %s222
      %s225 = sphi 0, %s224
      %s239 = sphi 0, %s225
      %s243 = sphi 0, %s243
      %s245 = sphi 0, %s243
      %s246 = sphi 0, %s245
      %s260 = sphi 0, %s246
      %s266 = sphi 0, %s268
      %s269 = sphi 0, %s266
      %s270 = sphi 0, %s269
      %s286 = sphi 0, %s270
    $region4: #{block_forward.1} parent=1 // loop_header_branch
      %23 = sbr.rel (%p21) target = $region8
    $region5: #{block_forward.1} parent=1 // loop_body
      %s25 = ssub.s32 %s20, 1
      %s26 = ssub.s32 %s20, 2
      %s27 = sadd.s32 %s20, 1
      %s28 = ssub.s32 %s20, %s27
      %p29 = scmp.eq.s32.totalorder %s28, 0
      %s31 = sadd.s32 %s30, 1
      %s32 = scalar_select %p29, %s30, %s31
      %p35 = pneg %p29
      %p36 = scmp.eq.s32.totalorder %s20, 1
      %p37 = por %p35, %p36
      %p38 = scmp.ne.s32.totalorder %s30, %s33
      %p39 = scmp.eq.s32.totalorder %s20, 0
      %p40 = por %p38, %p39
      %p41 = scmp.ne.s32.totalorder %s30, %s33
      %p42 = scmp.eq.s32.totalorder %s25, 1
      %p43 = por %p41, %p42
      %p44 = scmp.ne.s32.totalorder %s33, %s34
      %p45 = scmp.eq.s32.totalorder %s25, 0
      %p46 = por %p44, %p45
      %p47 = scmp.ne.s32.totalorder %s33, %s34
      %p48 = scmp.eq.s32.totalorder %s26, 1
      %p49 = por %p47, %p48
      %p51 = scmp.ne.s32.totalorder %s34, %s50
      %p52 = scmp.eq.s32.totalorder %s26, 0
      %p53 = por %p51, %p52
      %s55 = sadd.s32 %s54, 1
      %p58 = scmp.eq.s32.totalorder %s20, 1
      %p59 = scmp.ne.s32.totalorder %s54, %s56
      %p60 = scmp.eq.s32.totalorder %s20, 0
      %p61 = por %p59, %p60
      %p62 = scmp.ne.s32.totalorder %s54, %s56
      %p63 = scmp.eq.s32.totalorder %s25, 1
      %p64 = por %p62, %p63
      %p65 = scmp.ne.s32.totalorder %s56, %s57
      %p66 = scmp.eq.s32.totalorder %s25, 0
      %p67 = por %p65, %p66
      %p68 = scmp.ne.s32.totalorder %s56, %s57
      %p69 = scmp.eq.s32.totalorder %s26, 1
      %p70 = por %p68, %p69
      %p72 = scmp.ne.s32.totalorder %s57, %s71
      %p73 = scmp.eq.s32.totalorder %s26, 0
      %p74 = por %p72, %p73
      %s76 = sadd.s32 %s75, 1
      %p79 = scmp.eq.s32.totalorder %s20, 1
      %p80 = scmp.ne.s32.totalorder %s75, %s77
      %p81 = scmp.eq.s32.totalorder %s20, 0
      %p82 = por %p80, %p81
      %p83 = scmp.ne.s32.totalorder %s75, %s77
      %p84 = scmp.eq.s32.totalorder %s25, 1
      %p85 = por %p83, %p84
      %p86 = scmp.ne.s32.totalorder %s77, %s78
      %p87 = scmp.eq.s32.totalorder %s25, 0
      %p88 = por %p86, %p87
      %p89 = scmp.ne.s32.totalorder %s77, %s78
      %p90 = scmp.eq.s32.totalorder %s26, 1
      %p91 = por %p89, %p90
      %p93 = scmp.ne.s32.totalorder %s78, %s92
      %p94 = scmp.eq.s32.totalorder %s26, 0
      %p95 = por %p93, %p94
      %s97 = sadd.s32 %s96, 1
      %p100 = scmp.eq.s32.totalorder %s20, 1
      %p101 = scmp.ne.s32.totalorder %s96, %s98
      %p102 = scmp.eq.s32.totalorder %s20, 0
      %p103 = por %p101, %p102
      %p104 = scmp.ne.s32.totalorder %s96, %s98
      %p105 = scmp.eq.s32.totalorder %s25, 1
      %p106 = por %p104, %p105
      %p107 = scmp.ne.s32.totalorder %s98, %s99
      %p108 = scmp.eq.s32.totalorder %s25, 0
      %p109 = por %p107, %p108
      %p110 = scmp.ne.s32.totalorder %s98, %s99
      %p111 = scmp.eq.s32.totalorder %s26, 1
      %p112 = por %p110, %p111
      %p114 = scmp.ne.s32.totalorder %s99, %s113
      %p115 = scmp.eq.s32.totalorder %s26, 0
      %p116 = por %p114, %p115
      %s118 = sadd.s32 %s117, 1
      %p121 = scmp.eq.s32.totalorder %s20, 1
      %p122 = scmp.ne.s32.totalorder %s117, %s119
      %p123 = scmp.eq.s32.totalorder %s20, 0
      %p124 = por %p122, %p123
      %p125 = scmp.ne.s32.totalorder %s117, %s119
      %p126 = scmp.eq.s32.totalorder %s25, 1
      %p127 = por %p125, %p126
      %p128 = scmp.ne.s32.totalorder %s119, %s120
      %p129 = scmp.eq.s32.totalorder %s25, 0
      %p130 = por %p128, %p129
      %p131 = scmp.ne.s32.totalorder %s119, %s120
      %p132 = scmp.eq.s32.totalorder %s26, 1
      %p133 = por %p131, %p132
      %p135 = scmp.ne.s32.totalorder %s120, %s134
      %p136 = scmp.eq.s32.totalorder %s26, 0
      %p137 = por %p135, %p136
      %s139 = sadd.s32 %s138, 1
      %p142 = scmp.eq.s32.totalorder %s20, 1
      %p143 = scmp.ne.s32.totalorder %s138, %s140
      %p144 = scmp.eq.s32.totalorder %s20, 0
      %p145 = por %p143, %p144
      %p146 = scmp.ne.s32.totalorder %s138, %s140
      %p147 = scmp.eq.s32.totalorder %s25, 1
      %p148 = por %p146, %p147
      %p149 = scmp.ne.s32.totalorder %s140, %s141
      %p150 = scmp.eq.s32.totalorder %s25, 0
      %p151 = por %p149, %p150
      %p152 = scmp.ne.s32.totalorder %s140, %s141
      %p153 = scmp.eq.s32.totalorder %s26, 1
      %p154 = por %p152, %p153
      %p156 = scmp.ne.s32.totalorder %s141, %s155
      %p157 = scmp.eq.s32.totalorder %s26, 0
      %p158 = por %p156, %p157
      %s160 = sadd.s32 %s159, 1
      %p163 = scmp.eq.s32.totalorder %s20, 1
      %p164 = scmp.ne.s32.totalorder %s159, %s161
      %p165 = scmp.eq.s32.totalorder %s20, 0
      %p166 = por %p164, %p165
      %p167 = scmp.ne.s32.totalorder %s159, %s161
      %p168 = scmp.eq.s32.totalorder %s25, 1
      %p169 = por %p167, %p168
      %p170 = scmp.ne.s32.totalorder %s161, %s162
      %p171 = scmp.eq.s32.totalorder %s25, 0
      %p172 = por %p170, %p171
      %p173 = scmp.ne.s32.totalorder %s161, %s162
      %p174 = scmp.eq.s32.totalorder %s26, 1
      %p175 = por %p173, %p174
      %p177 = scmp.ne.s32.totalorder %s162, %s176
      %p178 = scmp.eq.s32.totalorder %s26, 0
      %p179 = por %p177, %p178
      %s181 = sadd.s32 %s180, 1
      %p184 = scmp.eq.s32.totalorder %s20, 1
      %p185 = scmp.ne.s32.totalorder %s180, %s182
      %p186 = scmp.eq.s32.totalorder %s20, 0
      %p187 = por %p185, %p186
      %p188 = scmp.ne.s32.totalorder %s180, %s182
      %p189 = scmp.eq.s32.totalorder %s25, 1
      %p190 = por %p188, %p189
      %p191 = scmp.ne.s32.totalorder %s182, %s183
      %p192 = scmp.eq.s32.totalorder %s25, 0
      %p193 = por %p191, %p192
      %p194 = scmp.ne.s32.totalorder %s182, %s183
      %p195 = scmp.eq.s32.totalorder %s26, 1
      %p196 = por %p194, %p195
      %p198 = scmp.ne.s32.totalorder %s183, %s197
      %p199 = scmp.eq.s32.totalorder %s26, 0
      %p200 = por %p198, %p199
      %s202 = sadd.s32 %s201, 1
      %p205 = scmp.eq.s32.totalorder %s20, 1
      %p206 = scmp.ne.s32.totalorder %s201, %s203
      %p207 = scmp.eq.s32.totalorder %s20, 0
      %p208 = por %p206, %p207
      %p209 = scmp.ne.s32.totalorder %s201, %s203
      %p210 = scmp.eq.s32.totalorder %s25, 1
      %p211 = por %p209, %p210
      %p212 = scmp.ne.s32.totalorder %s203, %s204
      %p213 = scmp.eq.s32.totalorder %s25, 0
      %p214 = por %p212, %p213
      %p215 = scmp.ne.s32.totalorder %s203, %s204
      %p216 = scmp.eq.s32.totalorder %s26, 1
      %p217 = por %p215, %p216
      %p219 = scmp.ne.s32.totalorder %s204, %s218
      %p220 = scmp.eq.s32.totalorder %s26, 0
      %p221 = por %p219, %p220
      %s223 = sadd.s32 %s222, 1
      %p226 = scmp.eq.s32.totalorder %s20, 1
      %p227 = scmp.ne.s32.totalorder %s222, %s224
      %p228 = scmp.eq.s32.totalorder %s20, 0
      %p229 = por %p227, %p228
      %p230 = scmp.ne.s32.totalorder %s222, %s224
      %p231 = scmp.eq.s32.totalorder %s25, 1
      %p232 = por %p230, %p231
      %p233 = scmp.ne.s32.totalorder %s224, %s225
      %p234 = scmp.eq.s32.totalorder %s25, 0
      %p235 = por %p233, %p234
      %p236 = scmp.ne.s32.totalorder %s224, %s225
      %p237 = scmp.eq.s32.totalorder %s26, 1
      %p238 = por %p236, %p237
      %p240 = scmp.ne.s32.totalorder %s225, %s239
      %p241 = scmp.eq.s32.totalorder %s26, 0
      %p242 = por %p240, %p241
      %s244 = sadd.s32 %s243, 1
      %p247 = scmp.eq.s32.totalorder %s20, 1
      %p248 = scmp.ne.s32.totalorder %s243, %s245
      %p249 = scmp.eq.s32.totalorder %s20, 0
      %p250 = por %p248, %p249
      %p251 = scmp.ne.s32.totalorder %s243, %s245
      %p252 = scmp.eq.s32.totalorder %s25, 1
      %p253 = por %p251, %p252
      %p254 = scmp.ne.s32.totalorder %s245, %s246
      %p255 = scmp.eq.s32.totalorder %s25, 0
      %p256 = por %p254, %p255
      %p257 = scmp.ne.s32.totalorder %s245, %s246
      %p258 = scmp.eq.s32.totalorder %s26, 1
      %p259 = por %p257, %p258
      %p261 = scmp.ne.s32.totalorder %s246, %s260
      %p262 = scmp.eq.s32.totalorder %s26, 0
      %p263 = por %p261, %p262
      %s264 = ssub.s32 %s20, %s27
      %p265 = scmp.eq.s32.totalorder %s264, 0
      %s267 = sadd.s32 %s266, 1
      %s268 = scalar_select %p265, %s266, %s267
      %p271 = pneg %p265
      %p272 = scmp.eq.s32.totalorder %s20, 1
      %p273 = por %p271, %p272
      %p274 = scmp.ne.s32.totalorder %s266, %s269
      %p275 = scmp.eq.s32.totalorder %s20, 0
      %p276 = por %p274, %p275
      %p277 = scmp.ne.s32.totalorder %s266, %s269
      %p278 = scmp.eq.s32.totalorder %s25, 1
      %p279 = por %p277, %p278
      %p280 = scmp.ne.s32.totalorder %s269, %s270
      %p281 = scmp.eq.s32.totalorder %s25, 0
      %p282 = por %p280, %p281
      %p283 = scmp.ne.s32.totalorder %s269, %s270
      %p284 = scmp.eq.s32.totalorder %s26, 1
      %p285 = por %p283, %p284
      %p287 = scmp.ne.s32.totalorder %s270, %s286
      %p288 = scmp.eq.s32.totalorder %s26, 0
      %p289 = por %p287, %p288
      %p290 = scmp.le.s32.totalorder 1, %s20
      %p291 = scmp.lt.s32.totalorder %s20, 3
      %p292 = pnand %p290, %p291
      %p293 = pneg %p292
      // Predicated region
      $region9: #{block_forward.1} parent=5 // pred_check
        _
      $region10: #{block_forward.1} parent=5 // pred_check_branch
        %295 = sbr.rel (%p292) target = $region12
      $region11: #{block_forward.1} parent=5 // pred_region
        %s296 = ssub.s32 %s20, 1
        // Predicated region
        $region13: #{block_forward.1} parent=11 // pred_check
          %p297 = pneg %p67
        $region14: #{block_forward.1} parent=11 // pred_check_branch
          %299 = sbr.rel (%p297) target = $region16
        $region15: #{block_forward.1} parent=11 // pred_region
          _
        $region16: #{block_forward.1} parent=11 // pred_fallthru
          _
        // Predicated region
        $region17: #{block_forward.1} parent=11 // pred_check
          %p300 = pneg %p88
        $region18: #{block_forward.1} parent=11 // pred_check_branch
          %302 = sbr.rel (%p300) target = $region20
        $region19: #{block_forward.1} parent=11 // pred_region
          _
        $region20: #{block_forward.1} parent=11 // pred_fallthru
          _
        // Predicated region
        $region21: #{block_forward.1} parent=11 // pred_check
          %p303 = pneg %p109
        $region22: #{block_forward.1} parent=11 // pred_check_branch
          %305 = sbr.rel (%p303) target = $region24
        $region23: #{block_forward.1} parent=11 // pred_region
          _
        $region24: #{block_forward.1} parent=11 // pred_fallthru
          _
        // Predicated region
        $region25: #{block_forward.1} parent=11 // pred_check
          %p306 = pneg %p130
        $region26: #{block_forward.1} parent=11 // pred_check_branch
          %308 = sbr.rel (%p306) target = $region28
        $region27: #{block_forward.1} parent=11 // pred_region
          _
        $region28: #{block_forward.1} parent=11 // pred_fallthru
          _
        // Predicated region
        $region29: #{block_forward.1} parent=11 // pred_check
          %p309 = pneg %p151
        $region30: #{block_forward.1} parent=11 // pred_check_branch
          %311 = sbr.rel (%p309) target = $region32
        $region31: #{block_forward.1} parent=11 // pred_region
          _
        $region32: #{block_forward.1} parent=11 // pred_fallthru
          _
        // Predicated region
        $region33: #{block_forward.1} parent=11 // pred_check
          %p312 = pneg %p172
        $region34: #{block_forward.1} parent=11 // pred_check_branch
          %314 = sbr.rel (%p312) target = $region36
        $region35: #{block_forward.1} parent=11 // pred_region
          _
        $region36: #{block_forward.1} parent=11 // pred_fallthru
          _
        // Predicated region
        $region37: #{block_forward.1} parent=11 // pred_check
          %p315 = pneg %p193
        $region38: #{block_forward.1} parent=11 // pred_check_branch
          %317 = sbr.rel (%p315) target = $region40
        $region39: #{block_forward.1} parent=11 // pred_region
          _
        $region40: #{block_forward.1} parent=11 // pred_fallthru
          _
        // Predicated region
        $region41: #{block_forward.1} parent=11 // pred_check
          %p318 = pneg %p214
        $region42: #{block_forward.1} parent=11 // pred_check_branch
          %320 = sbr.rel (%p318) target = $region44
        $region43: #{block_forward.1} parent=11 // pred_region
          _
        $region44: #{block_forward.1} parent=11 // pred_fallthru
          _
        // Predicated region
        $region45: #{block_forward.1} parent=11 // pred_check
          %p321 = pneg %p235
        $region46: #{block_forward.1} parent=11 // pred_check_branch
          %323 = sbr.rel (%p321) target = $region48
        $region47: #{block_forward.1} parent=11 // pred_region
          _
        $region48: #{block_forward.1} parent=11 // pred_fallthru
          _
        // Predicated region
        $region49: #{block_forward.1} parent=11 // pred_check
          %p324 = pneg %p256
        $region50: #{block_forward.1} parent=11 // pred_check_branch
          %326 = sbr.rel (%p324) target = $region52
        $region51: #{block_forward.1} parent=11 // pred_region
          _
        $region52: #{block_forward.1} parent=11 // pred_fallthru
          _
      $region12: #{block_forward.1} parent=5 // pred_fallthru
        _
      %p327 = scmp.lt.s32.totalorder %s20, 2
      // Predicated region
      $region53: #{block_forward.1} parent=5 // pred_check
        %p328 = pneg %p327
      $region54: #{block_forward.1} parent=5 // pred_check_branch
        %330 = sbr.rel (%p328) target = $region56
      $region55: #{block_forward.1} parent=5 // pred_region
        // Predicated region
        $region57: #{block_forward.1} parent=55 // pred_check
          %p331 = pneg %p40
        $region58: #{block_forward.1} parent=55 // pred_check_branch
          %333 = sbr.rel (%p331) target = $region60
        $region59: #{block_forward.1} parent=55 // pred_region
          %p334 = scmp.lt.s32.totalorder %s20, 1
          %s335 = scalar_select %p334, %s20, 1
          %s336 = smul.addr %s335, 8
          %s337 = scalar_lea.vmem %s0, %s336
        $region60: #{block_forward.1} parent=55 // pred_fallthru
          _
      $region56: #{block_forward.1} parent=5 // pred_fallthru
        _
      %p338 = scmp.le.s32.totalorder 1, %s20
      %p339 = scmp.lt.s32.totalorder %s20, 3
      %p340 = pnand %p338, %p339
      %p341 = pneg %p340
      // Predicated region
      $region61: #{block_forward.1} parent=5 // pred_check
        _
      $region62: #{block_forward.1} parent=5 // pred_check_branch
        %343 = sbr.rel (%p340) target = $region64
      $region63: #{block_forward.1} parent=5 // pred_region
        %s344 = ssub.s32 %s20, 1
        %p345 = scmp.lt.s32.totalorder %s25, 1
        %s346 = scalar_select %p345, %s25, 1
        %s347 = smul.addr %s346, 8
        %s348 = scalar_lea.vmem %s0, %s347
        %p349 = pneg %p46
        %p350 = pneg %p43
        %p351 = pneg %p67
        %p352 = pneg %p64
        %p353 = pneg %p88
        %p354 = pneg %p85
        %p355 = pneg %p109
        %p356 = pneg %p106
        %p357 = pneg %p130
        %p358 = pneg %p127
        %p359 = pneg %p151
        %p360 = pneg %p148
        %p361 = pneg %p172
        %p362 = pneg %p169
        %p363 = pneg %p193
        %p364 = pneg %p190
        %p365 = pneg %p214
        %p366 = pneg %p211
        %p367 = pneg %p235
        %p368 = pneg %p232
        %p369 = pneg %p256
        %p370 = pneg %p253
        %p371 = pneg %p282
        %p372 = pneg %p279
        %s373 = sand.u32 %s269, 1
        %s374 = scalar_lea.sflag [#allocation3], %s373
        %s375 = sand.u32 %s269, 1
        %s376 = smul.addr %s375, 8
        %s377 = scalar_lea.vmem [#allocation2], %s376
        %p378 = scmp.lt.s32.totalorder %s25, 1
        %s379 = scalar_select %p378, %s25, 1
        %s380 = smul.addr %s379, 8
        %s381 = scalar_lea.vmem %s0, %s380
        %v382 = vld [vmem:[%s381] sm:$0xff]
        %v383 = vld [vmem:[%s1] sm:$0xff]
        %v384 = vld [vmem:[%s1 + $0x8] sm:$0xff]
        %v385 = vld [vmem:[%s1 + $0x10] sm:$0xff]
        %v386 = vld [vmem:[%s1 + $0x18] sm:$0xff]
        %v387 = vld [vmem:[%s2] sm:$0x1]
        %v388 = vld [vmem:[%s3] sm:$0xff]
        %v389 = vld [vmem:[%s3 + $0x8] sm:$0xff]
        %v390 = vld [vmem:[%s3 + $0x10] sm:$0xff]
        %v391 = vld [vmem:[%s3 + $0x18] sm:$0xff]
        %v392 = vld [vmem:[%s4] sm:$0x1]
        %v393 = vld [vmem:[%s5] sm:$0xff]
        %v394 = vld [vmem:[%s5 + $0x8] sm:$0xff]
        %v395 = vld [vmem:[%s5 + $0x10] sm:$0xff]
        %v396 = vld [vmem:[%s5 + $0x18] sm:$0xff]
        %v397 = vld [vmem:[%s6] sm:$0x1]
        %v399 = vperm.slane %v387, 0
        %vm401 = vcmask 261120
        %v403 = vsel %vm401, %v382, 0
        %405 = vmatpush.msra.mxu0 0.0
        %406 = vmatpush.msra.mxu0 0.0
        %407 = vmatpush.msra.mxu0 0.0
        %408 = vmatpush.msra.mxu0 0.0
        %409 = vmatpush.msra.mxu0 0.0
        %410 = vmatpush.msra.mxu0 0.0
        %411 = vmatpush.msra.mxu0 0.0
        %412 = vmatpush.msra.mxu0 0.0
        %413 = vmatpush.msra.mxu0 0.0
        %414 = vmatpush.msra.mxu0 0.0
        %415 = vmatpush.msra.mxu0 0.0
        %416 = vmatpush.msra.mxu0 0.0
        %417 = vmatpush.msra.mxu0 %v386
        %418 = vmatpush.msra.mxu0 %v385
        %419 = vmatpush.msra.mxu0 %v384
        %420 = vmatpush.msra.mxu0 %v383
        %421 = vmatmul.f32.gmra.mxu0 %v403
        %v422 = vpop.f32.mrf.mxu0
        %v423 = vadd.f32 %v399, %v422
        %424 = vdwg.mxu0
        %v426 = vperm.slane %v392, 0
        %428 = vmatpush.msra.mxu0 0.0
        %429 = vmatpush.msra.mxu0 0.0
        %430 = vmatpush.msra.mxu0 0.0
        %431 = vmatpush.msra.mxu0 0.0
        %432 = vmatpush.msra.mxu0 0.0
        %433 = vmatpush.msra.mxu0 0.0
        %434 = vmatpush.msra.mxu0 0.0
        %435 = vmatpush.msra.mxu0 0.0
        %436 = vmatpush.msra.mxu0 0.0
        %437 = vmatpush.msra.mxu0 0.0
        %438 = vmatpush.msra.mxu0 0.0
        %439 = vmatpush.msra.mxu0 0.0
        %440 = vmatpush.msra.mxu0 %v391
        %441 = vmatpush.msra.mxu0 %v390
        %442 = vmatpush.msra.mxu0 %v389
        %443 = vmatpush.msra.mxu0 %v388
        %444 = vmatmul.f32.gmra.mxu0 %v403
        %v445 = vpop.f32.mrf.mxu0
        %v446 = vadd.f32 %v426, %v445
        %447 = vdwg.mxu0
        %v449 = vperm.slane %v397, 0
        %451 = vmatpush.msra.mxu0 0.0
        %452 = vmatpush.msra.mxu0 0.0
        %453 = vmatpush.msra.mxu0 0.0
        %454 = vmatpush.msra.mxu0 0.0
        %455 = vmatpush.msra.mxu0 0.0
        %456 = vmatpush.msra.mxu0 0.0
        %457 = vmatpush.msra.mxu0 0.0
        %458 = vmatpush.msra.mxu0 0.0
        %459 = vmatpush.msra.mxu0 0.0
        %460 = vmatpush.msra.mxu0 0.0
        %461 = vmatpush.msra.mxu0 0.0
        %462 = vmatpush.msra.mxu0 0.0
        %463 = vmatpush.msra.mxu0 %v396
        %464 = vmatpush.msra.mxu0 %v395
        %465 = vmatpush.msra.mxu0 %v394
        %466 = vmatpush.msra.mxu0 %v393
        %467 = vmatmul.f32.gmra.mxu0 %v403
        %v468 = vpop.f32.mrf.mxu0
        %v469 = vadd.f32 %v449, %v468
        %470 = vdwg.mxu0
        %v471 = vlaneseq
        %v472 = vshrl.u32 %v471, 7
        %v473 = vlaneseq
        %v474 = vand.u32 %v473, 127
        %vm475 = vcmp.le.s32.totalorder %v474, %v472
        %vm476 = vcmask 64512
        %v478 = vsel %vm476, %v423, 0
        %v481 = vsel %vm476, %v446, 0
        %483 = vmatpush.xpose.msra.mxu0 0.0
        %484 = vmatpush.xpose.msra.mxu0 0.0
        %485 = vmatpush.xpose.msra.mxu0 0.0
        %486 = vmatpush.xpose.msra.mxu0 0.0
        %487 = vmatpush.xpose.msra.mxu0 0.0
        %488 = vmatpush.xpose.msra.mxu0 0.0
        %489 = vmatpush.xpose.msra.mxu0 0.0
        %490 = vmatpush.xpose.msra.mxu0 0.0
        %491 = vmatpush.xpose.msra.mxu0 0.0
        %492 = vmatpush.xpose.msra.mxu0 0.0
        %493 = vmatpush.xpose.msra.mxu0 0.0
        %494 = vmatpush.xpose.msra.mxu0 0.0
        %495 = vmatpush.xpose.msra.mxu0 0.0
        %496 = vmatpush.xpose.msra.mxu0 0.0
        %497 = vmatpush.xpose.msra.mxu0 0.0
        %498 = vmatpush.xpose.msra.mxu0 %v481
        %499 = vmatmul.f32.gmra.mxu0 %v478
        %v500 = vpop.f32.mrf.mxu0
        %v501 = vadd.f32 0.0, %v500
        %502 = vdwg.mxu0
        %v503 = vmul.f32 %v501, 0.17677669
        %v504 = vsel %vm475, %v503, -1e+30
        %v505 = vsel %vm476, %v504, -inf
        %506 = vmax.xlane.f32.xlu0 %v505
        %v507 = vpop.xlane.xlu0 %506
        %v508 = vsub.f32 %v504, %v507
        %v509 = vmul.f32 %v508, 1.442695
        %v510 = vpow.pop %v509
        %v511 = vsel %vm476, %v510, 0.0
        %512 = vadd.xlane.f32.xlu0 %v511
        %v513 = vpop.xlane.xlu0 %512
        %v514 = vrcp.pop %v513
        %v515 = vmul.f32 %v513, %v514
        %v516 = vsub.f32 1.0, %v515
        %v517 = vmul.f32 %v514, %v516
        %v518 = vadd.f32 %v514, %v517
        %vm519 = vweird.f32 %v513
        %vm520 = vweird.f32 %v514
        %vm521 = vmor %vm519, %vm520
        %v522 = vsel %vm521, %v514, %v518
        %v523 = vand.u32 2147483647, %v513
        %vm524 = vcmp.eq.f32.partialorder %v523, 8.507059e+37
        %v525 = vand.u32 %v513, 2147483648
        %v526 = vor.u32 1.1754944e-38, %v525
        %v527 = vsel %vm524, %v526, %v522
        %v528 = vmul.f32 1.0, %v527
        %v529 = vmul.f32 %v510, %v528
        %v531 = vsel %vm476, %v529, 0
        %533 = vmatpush.msra.mxu0 0.0
        %534 = vmatpush.msra.mxu0 0.0
        %535 = vmatpush.msra.mxu0 0.0
        %536 = vmatpush.msra.mxu0 0.0
        %537 = vmatpush.msra.mxu0 0.0
        %538 = vmatpush.msra.mxu0 0.0
        %539 = vmatpush.msra.mxu0 0.0
        %540 = vmatpush.msra.mxu0 0.0
        %541 = vmatpush.msra.mxu0 0.0
        %542 = vmatpush.msra.mxu0 0.0
        %543 = vmatpush.msra.mxu0 0.0
        %544 = vmatpush.msra.mxu0 0.0
        %545 = vmatpush.msra.mxu0 0.0
        %546 = vmatpush.msra.mxu0 0.0
        %547 = vmatpush.msra.mxu0 0.0
        %548 = vmatpush.msra.mxu0 %v469
        %549 = vmatmul.f32.gmra.mxu0 %v531
        %v550 = vpop.f32.mrf.mxu0
        %v551 = vadd.f32 0.0, %v550
        %552 = vdwg.mxu0
        %553 = vrot.lane.b32.xlu0 %v423, 120
        %v554 = vpop.permute.xlu0 %553
        %555 = vrot.lane.b32.xlu0 %v446, 120
        %v556 = vpop.permute.xlu0 %555
        %v557 = vsel %vm476, %v554, 0
        %v559 = vsel %vm476, %v556, 0
        %561 = vmatpush.xpose.msra.mxu0 0.0
        %562 = vmatpush.xpose.msra.mxu0 0.0
        %563 = vmatpush.xpose.msra.mxu0 0.0
        %564 = vmatpush.xpose.msra.mxu0 0.0
        %565 = vmatpush.xpose.msra.mxu0 0.0
        %566 = vmatpush.xpose.msra.mxu0 0.0
        %567 = vmatpush.xpose.msra.mxu0 0.0
        %568 = vmatpush.xpose.msra.mxu0 0.0
        %569 = vmatpush.xpose.msra.mxu0 0.0
        %570 = vmatpush.xpose.msra.mxu0 0.0
        %571 = vmatpush.xpose.msra.mxu0 0.0
        %572 = vmatpush.xpose.msra.mxu0 0.0
        %573 = vmatpush.xpose.msra.mxu0 0.0
        %574 = vmatpush.xpose.msra.mxu0 0.0
        %575 = vmatpush.xpose.msra.mxu0 0.0
        %576 = vmatpush.xpose.msra.mxu0 %v559
        %577 = vmatmul.f32.gmra.mxu0 %v557
        %v578 = vpop.f32.mrf.mxu0
        %v579 = vadd.f32 0.0, %v578
        %580 = vdwg.mxu0
        %v581 = vmul.f32 %v579, 0.17677669
        %v582 = vsel %vm475, %v581, -1e+30
        %v583 = vsel %vm476, %v582, -inf
        %584 = vmax.xlane.f32.xlu0 %v583
        %v585 = vpop.xlane.xlu0 %584
        %v586 = vsub.f32 %v582, %v585
        %v587 = vmul.f32 %v586, 1.442695
        %v588 = vpow.pop %v587
        %v589 = vsel %vm476, %v588, 0.0
        %590 = vadd.xlane.f32.xlu0 %v589
        %v591 = vpop.xlane.xlu0 %590
        %v592 = vrcp.pop %v591
        %v593 = vmul.f32 %v591, %v592
        %v594 = vsub.f32 1.0, %v593
        %v595 = vmul.f32 %v592, %v594
        %v596 = vadd.f32 %v592, %v595
        %vm597 = vweird.f32 %v591
        %vm598 = vweird.f32 %v592
        %vm599 = vmor %vm597, %vm598
        %v600 = vsel %vm599, %v592, %v596
        %v601 = vand.u32 2147483647, %v591
        %vm602 = vcmp.eq.f32.partialorder %v601, 8.507059e+37
        %v603 = vand.u32 %v591, 2147483648
        %v604 = vor.u32 1.1754944e-38, %v603
        %v605 = vsel %vm602, %v604, %v600
        %v606 = vmul.f32 1.0, %v605
        %v607 = vmul.f32 %v588, %v606
        %609 = vrot.lane.b32.xlu0 %v469, 120
        %v610 = vpop.permute.xlu0 %609
        %v613 = vsel %vm476, %v607, 0
        %615 = vmatpush.msra.mxu0 0.0
        %616 = vmatpush.msra.mxu0 0.0
        %617 = vmatpush.msra.mxu0 0.0
        %618 = vmatpush.msra.mxu0 0.0
        %619 = vmatpush.msra.mxu0 0.0
        %620 = vmatpush.msra.mxu0 0.0
        %621 = vmatpush.msra.mxu0 0.0
        %622 = vmatpush.msra.mxu0 0.0
        %623 = vmatpush.msra.mxu0 0.0
        %624 = vmatpush.msra.mxu0 0.0
        %625 = vmatpush.msra.mxu0 0.0
        %626 = vmatpush.msra.mxu0 0.0
        %627 = vmatpush.msra.mxu0 0.0
        %628 = vmatpush.msra.mxu0 0.0
        %629 = vmatpush.msra.mxu0 0.0
        %630 = vmatpush.msra.mxu0 %v610
        %631 = vmatmul.f32.gmra.mxu0 %v613
        %v632 = vpop.f32.mrf.mxu0
        %v633 = vadd.f32 0.0, %v632
        %634 = vdwg.mxu0
        %635 = vrot.lane.b32.xlu0 %v423, 112
        %v636 = vpop.permute.xlu0 %635
        %637 = vrot.lane.b32.xlu0 %v446, 112
        %v638 = vpop.permute.xlu0 %637
        %v639 = vsel %vm476, %v636, 0
        %v641 = vsel %vm476, %v638, 0
        %643 = vmatpush.xpose.msra.mxu0 0.0
        %644 = vmatpush.xpose.msra.mxu0 0.0
        %645 = vmatpush.xpose.msra.mxu0 0.0
        %646 = vmatpush.xpose.msra.mxu0 0.0
        %647 = vmatpush.xpose.msra.mxu0 0.0
        %648 = vmatpush.xpose.msra.mxu0 0.0
        %649 = vmatpush.xpose.msra.mxu0 0.0
        %650 = vmatpush.xpose.msra.mxu0 0.0
        %651 = vmatpush.xpose.msra.mxu0 0.0
        %652 = vmatpush.xpose.msra.mxu0 0.0
        %653 = vmatpush.xpose.msra.mxu0 0.0
        %654 = vmatpush.xpose.msra.mxu0 0.0
        %655 = vmatpush.xpose.msra.mxu0 0.0
        %656 = vmatpush.xpose.msra.mxu0 0.0
        %657 = vmatpush.xpose.msra.mxu0 0.0
        %658 = vmatpush.xpose.msra.mxu0 %v641
        %659 = vmatmul.f32.gmra.mxu0 %v639
        %v660 = vpop.f32.mrf.mxu0
        %v661 = vadd.f32 0.0, %v660
        %662 = vdwg.mxu0
        %v663 = vmul.f32 %v661, 0.17677669
        %v664 = vsel %vm475, %v663, -1e+30
        %v665 = vsel %vm476, %v664, -inf
        %666 = vmax.xlane.f32.xlu0 %v665
        %v667 = vpop.xlane.xlu0 %666
        %v668 = vsub.f32 %v664, %v667
        %v669 = vmul.f32 %v668, 1.442695
        %v670 = vpow.pop %v669
        %v671 = vsel %vm476, %v670, 0.0
        %672 = vadd.xlane.f32.xlu0 %v671
        %v673 = vpop.xlane.xlu0 %672
        %v674 = vrcp.pop %v673
        %v675 = vmul.f32 %v673, %v674
        %v676 = vsub.f32 1.0, %v675
        %v677 = vmul.f32 %v674, %v676
        %v678 = vadd.f32 %v674, %v677
        %vm679 = vweird.f32 %v673
        %vm680 = vweird.f32 %v674
        %vm681 = vmor %vm679, %vm680
        %v682 = vsel %vm681, %v674, %v678
        %v683 = vand.u32 2147483647, %v673
        %vm684 = vcmp.eq.f32.partialorder %v683, 8.507059e+37
        %v685 = vand.u32 %v673, 2147483648
        %v686 = vor.u32 1.1754944e-38, %v685
        %v687 = vsel %vm684, %v686, %v682
        %v688 = vmul.f32 1.0, %v687
        %v689 = vmul.f32 %v670, %v688
        %690 = vrot.lane.b32.xlu0 %v469, 112
        %v691 = vpop.permute.xlu0 %690
        %v694 = vsel %vm476, %v689, 0
        %696 = vmatpush.msra.mxu0 0.0
        %697 = vmatpush.msra.mxu0 0.0
        %698 = vmatpush.msra.mxu0 0.0
        %699 = vmatpush.msra.mxu0 0.0
        %700 = vmatpush.msra.mxu0 0.0
        %701 = vmatpush.msra.mxu0 0.0
        %702 = vmatpush.msra.mxu0 0.0
        %703 = vmatpush.msra.mxu0 0.0
        %704 = vmatpush.msra.mxu0 0.0
        %705 = vmatpush.msra.mxu0 0.0
        %706 = vmatpush.msra.mxu0 0.0
        %707 = vmatpush.msra.mxu0 0.0
        %708 = vmatpush.msra.mxu0 0.0
        %709 = vmatpush.msra.mxu0 0.0
        %710 = vmatpush.msra.mxu0 0.0
        %711 = vmatpush.msra.mxu0 %v691
        %712 = vmatmul.f32.gmra.mxu0 %v694
        %v713 = vpop.f32.mrf.mxu0
        %v714 = vadd.f32 0.0, %v713
        %715 = vdwg.mxu0
        %716 = vrot.lane.b32.xlu0 %v423, 104
        %v717 = vpop.permute.xlu0 %716
        %718 = vrot.lane.b32.xlu0 %v446, 104
        %v719 = vpop.permute.xlu0 %718
        %v720 = vsel %vm476, %v717, 0
        %v722 = vsel %vm476, %v719, 0
        %724 = vmatpush.xpose.msra.mxu0 0.0
        %725 = vmatpush.xpose.msra.mxu0 0.0
        %726 = vmatpush.xpose.msra.mxu0 0.0
        %727 = vmatpush.xpose.msra.mxu0 0.0
        %728 = vmatpush.xpose.msra.mxu0 0.0
        %729 = vmatpush.xpose.msra.mxu0 0.0
        %730 = vmatpush.xpose.msra.mxu0 0.0
        %731 = vmatpush.xpose.msra.mxu0 0.0
        %732 = vmatpush.xpose.msra.mxu0 0.0
        %733 = vmatpush.xpose.msra.mxu0 0.0
        %734 = vmatpush.xpose.msra.mxu0 0.0
        %735 = vmatpush.xpose.msra.mxu0 0.0
        %736 = vmatpush.xpose.msra.mxu0 0.0
        %737 = vmatpush.xpose.msra.mxu0 0.0
        %738 = vmatpush.xpose.msra.mxu0 0.0
        %739 = vmatpush.xpose.msra.mxu0 %v722
        %740 = vmatmul.f32.gmra.mxu0 %v720
        %v741 = vpop.f32.mrf.mxu0
        %v742 = vadd.f32 0.0, %v741
        %743 = vdwg.mxu0
        %v744 = vmul.f32 %v742, 0.17677669
        %v745 = vsel %vm475, %v744, -1e+30
        %v746 = vsel %vm476, %v745, -inf
        %747 = vmax.xlane.f32.xlu0 %v746
        %v748 = vpop.xlane.xlu0 %747
        %v749 = vsub.f32 %v745, %v748
        %v750 = vmul.f32 %v749, 1.442695
        %v751 = vpow.pop %v750
        %v752 = vsel %vm476, %v751, 0.0
        %753 = vadd.xlane.f32.xlu0 %v752
        %v754 = vpop.xlane.xlu0 %753
        %v755 = vrcp.pop %v754
        %v756 = vmul.f32 %v754, %v755
        %v757 = vsub.f32 1.0, %v756
        %v758 = vmul.f32 %v755, %v757
        %v759 = vadd.f32 %v755, %v758
        %vm760 = vweird.f32 %v754
        %vm761 = vweird.f32 %v755
        %vm762 = vmor %vm760, %vm761
        %v763 = vsel %vm762, %v755, %v759
        %v764 = vand.u32 2147483647, %v754
        %vm765 = vcmp.eq.f32.partialorder %v764, 8.507059e+37
        %v766 = vand.u32 %v754, 2147483648
        %v767 = vor.u32 1.1754944e-38, %v766
        %v768 = vsel %vm765, %v767, %v763
        %v769 = vmul.f32 1.0, %v768
        %v770 = vmul.f32 %v751, %v769
        %771 = vrot.lane.b32.xlu0 %v469, 104
        %v772 = vpop.permute.xlu0 %771
        %v775 = vsel %vm476, %v770, 0
        %777 = vmatpush.msra.mxu0 0.0
        %778 = vmatpush.msra.mxu0 0.0
        %779 = vmatpush.msra.mxu0 0.0
        %780 = vmatpush.msra.mxu0 0.0
        %781 = vmatpush.msra.mxu0 0.0
        %782 = vmatpush.msra.mxu0 0.0
        %783 = vmatpush.msra.mxu0 0.0
        %784 = vmatpush.msra.mxu0 0.0
        %785 = vmatpush.msra.mxu0 0.0
        %786 = vmatpush.msra.mxu0 0.0
        %787 = vmatpush.msra.mxu0 0.0
        %788 = vmatpush.msra.mxu0 0.0
        %789 = vmatpush.msra.mxu0 0.0
        %790 = vmatpush.msra.mxu0 0.0
        %791 = vmatpush.msra.mxu0 0.0
        %792 = vmatpush.msra.mxu0 %v772
        %793 = vmatmul.f32.gmra.mxu0 %v775
        %v794 = vpop.f32.mrf.mxu0
        %v795 = vadd.f32 0.0, %v794
        %796 = vdwg.mxu0
        %798 = vrot.lane.b32.xlu0 %v633, 8
        %v799 = vpop.permute.xlu0 %798
        %802 = vrot.lane.b32.xlu0 %v714, 16
        %v803 = vpop.permute.xlu0 %802
        %806 = vrot.lane.b32.xlu0 %v795, 24
        %v807 = vpop.permute.xlu0 %806
        %v809 = vsel %vm476, %v551, %v799
        %vm810 = vcmask 130048
        %v811 = vsel %vm810, %v809, %v803
        %vm812 = vcmask 195584
        %v813 = vsel %vm812, %v811, %v807
        %v814 = vadd.f32 %v382, %v813
        %v815 = vld [vmem:[%s7] sm:$0xff]
        %v816 = vld [vmem:[%s7 + $0x8] sm:$0xff]
        %v817 = vld [vmem:[%s7 + $0x10] sm:$0xff]
        %v818 = vld [vmem:[%s7 + $0x18] sm:$0xff]
        %v819 = vld [vmem:[%s8] sm:$0x1]
        %v821 = vperm.slane %v819, 0
        %v824 = vsel %vm401, %v814, 0
        %826 = vmatpush.msra.mxu0 0.0
        %827 = vmatpush.msra.mxu0 0.0
        %828 = vmatpush.msra.mxu0 0.0
        %829 = vmatpush.msra.mxu0 0.0
        %830 = vmatpush.msra.mxu0 0.0
        %831 = vmatpush.msra.mxu0 0.0
        %832 = vmatpush.msra.mxu0 0.0
        %833 = vmatpush.msra.mxu0 0.0
        %834 = vmatpush.msra.mxu0 0.0
        %835 = vmatpush.msra.mxu0 0.0
        %836 = vmatpush.msra.mxu0 0.0
        %837 = vmatpush.msra.mxu0 0.0
        %838 = vmatpush.msra.mxu0 %v818
        %839 = vmatpush.msra.mxu0 %v817
        %840 = vmatpush.msra.mxu0 %v816
        %841 = vmatpush.msra.mxu0 %v815
        %842 = vmatmul.f32.gmra.mxu0 %v824
        %v843 = vpop.f32.mrf.mxu0
        %v844 = vadd.f32 %v821, %v843
        %845 = vdwg.mxu0
        %v846 = vmul.f32 %v844, 0.5
        %v847 = vmul.f32 %v844, 0.044715
        %v848 = vmul.f32 %v847, %v844
        %v849 = vmul.f32 %v848, %v844
        %v850 = vadd.f32 %v844, %v849
        %v851 = vmul.f32 %v850, 0.7978846
        %v852 = vtanh.pop %v851
        %v853 = vadd.f32 %v852, 1.0
        %v854 = vmul.f32 %v846, %v853
        %v855 = vld [vmem:[%s9] sm:$0xff]
        %v856 = vld [vmem:[%s9 + $0x8] sm:$0xff]
        %v857 = vld [vmem:[%s9 + $0x10] sm:$0xff]
        %v858 = vld [vmem:[%s9 + $0x18] sm:$0xff]
        %v859 = vld [vmem:[%s9 + $0x20] sm:$0xff]
        %v860 = vld [vmem:[%s9 + $0x28] sm:$0xff]
        %v861 = vld [vmem:[%s9 + $0x30] sm:$0xff]
        %v862 = vld [vmem:[%s9 + $0x38] sm:$0xff]
        %v863 = vld [vmem:[%s9 + $0x40] sm:$0xff]
        %v864 = vld [vmem:[%s9 + $0x48] sm:$0xff]
        %v865 = vld [vmem:[%s9 + $0x50] sm:$0xff]
        %v866 = vld [vmem:[%s9 + $0x58] sm:$0xff]
        %v867 = vld [vmem:[%s9 + $0x60] sm:$0xff]
        %v868 = vld [vmem:[%s9 + $0x68] sm:$0xff]
        %v869 = vld [vmem:[%s9 + $0x70] sm:$0xff]
        %v870 = vld [vmem:[%s9 + $0x78] sm:$0xff]
        %v871 = vld [vmem:[%s10] sm:$0x1]
        %v873 = vperm.slane %v871, 0
        %875 = vmatpush.msra.mxu0 %v870
        %876 = vmatpush.msra.mxu0 %v869
        %877 = vmatpush.msra.mxu0 %v868
        %878 = vmatpush.msra.mxu0 %v867
        %879 = vmatpush.msra.mxu0 %v866
        %880 = vmatpush.msra.mxu0 %v865
        %881 = vmatpush.msra.mxu0 %v864
        %882 = vmatpush.msra.mxu0 %v863
        %883 = vmatpush.msra.mxu0 %v862
        %884 = vmatpush.msra.mxu0 %v861
        %885 = vmatpush.msra.mxu0 %v860
        %886 = vmatpush.msra.mxu0 %v859
        %887 = vmatpush.msra.mxu0 %v858
        %888 = vmatpush.msra.mxu0 %v857
        %889 = vmatpush.msra.mxu0 %v856
        %890 = vmatpush.msra.mxu0 %v855
        %891 = vmatmul.f32.gmra.mxu0 %v854
        %v892 = vpop.f32.mrf.mxu0
        %v893 = vadd.f32 %v873, %v892
        %894 = vdwg.mxu0
        %v895 = vadd.f32 %v814, %v893
        %896 = vst.msk [vmem:[%s377] sm:$0xff] %vm401, %v895
        %s897 = sand.u32 %s269, 1
        %s898 = scalar_lea.sflag [#allocation3], %s897
        %s899 = sand.u32 %s269, 1
        %s900 = smul.addr %s899, 8
        %s901 = scalar_lea.vmem [#allocation2], %s900
        // Predicated region
        $region65: #{block_forward.1} parent=63 // pred_check
          %p902 = pneg %p279
        $region66: #{block_forward.1} parent=63 // pred_check_branch
          %904 = sbr.rel (%p902) target = $region68
        $region67: #{block_forward.1} parent=63 // pred_region
          %906 = vsyncadd %s898, 0
          %s907 = smul.addr %s25, 8
          %s908 = scalar_lea.hbm %s11, %s907
          %s910 = sshll.u32 %s901, 4
          %s911 = int_to_ptr.vmem [resolvable:$true] %s910
          %s912 = sshll.u32 %s908, 4
          %s913 = int_to_ptr.hbm [resolvable:$true] %s912
          %915 = dma.vmem_to_hbm [thread:$0]  %s911, 128, %s913, %s898
        $region68: #{block_forward.1} parent=63 // pred_fallthru
          _
      $region64: #{block_forward.1} parent=5 // pred_fallthru
        _
      %p916 = scmp.le.s32.totalorder 2, %s20
      // Predicated region
      $region69: #{block_forward.1} parent=5 // pred_check
        %p917 = pneg %p916
      $region70: #{block_forward.1} parent=5 // pred_check_branch
        %919 = sbr.rel (%p917) target = $region72
      $region71: #{block_forward.1} parent=5 // pred_region
        %s920 = ssub.s32 %s20, 2
        // Predicated region
        $region73: #{block_forward.1} parent=71 // pred_check
          %p921 = pneg %p285
        $region74: #{block_forward.1} parent=71 // pred_check_branch
          %923 = sbr.rel (%p921) target = $region76
        $region75: #{block_forward.1} parent=71 // pred_region
          %s924 = sand.u32 %s270, 1
          %s925 = scalar_lea.sflag [#allocation3], %s924
          %s926 = sand.u32 %s270, 1
          %s927 = smul.addr %s926, 8
          %s928 = scalar_lea.vmem [#allocation2], %s927
          %930 = dma.done %s925, 128
        $region76: #{block_forward.1} parent=71 // pred_fallthru
          _
      $region72: #{block_forward.1} parent=5 // pred_fallthru
        _
    $region6: #{block_forward.1} parent=1 // loop_footer
      %s24 = sadd.s32 1, %s20
    $region7: #{block_forward.1} parent=1 // loop_footer_branch
      %19 = sbr.rel target = $region3
    $region8: #{block_forward.1} parent=1 // loop_exit
      _
    %931 = vsyncpa [#allocation3], 1
    %s932 = scalar_lea.sflag [#allocation3], 1
    %933 = vsyncpa %s932, 1

</llo_original>
